<compile_context>
chip_gen: v7x
topology: tpu7x:2x2x1
jax: 0.10.0
libtpu: 0.0.40
codegen_flags: <defaults>
</compile_context>

<pallas_src>
import jax
import jax.numpy as jnp
from jax.experimental import pallas as pl
from jax.experimental.pallas import tpu as pltpu


def _transpose_tile_kernel(x_ref, o_ref):
    # x_ref: (tc, thw) tile of the (C, HW) slab ; o_ref: (thw, tc) tile of the
    # (HW, C) output.  Lowers to an XLU tile transpose (vector-extended slot),
    # which overlaps with the in/out DMAs of neighbouring grid steps.
    o_ref[...] = x_ref[...].T


def _cdiv(a: int, b: int) -> int:
    return -(-a // b)


def _pick_tiles(C: int, HW: int, B: int, itemsize: int,
                cap_c=None, cap_hw=None, target_steps: int = 16):
    """Pick (tc, thw) transpose tiles.

    Rules:
      * a tile is either the full dim (always a legal block) or a 128-multiple
        (each axis is the lane axis of one BlockSpec and the sublane axis of
        the other),
      * per-buffer cap of 512x512 keeps the 4 pipelined buffers ~<= 4 MiB f32
        (fits every scoped-VMEM default, incl. v7x's),
      * tiles are shrunk (down to a ~1 KiB DMA-burst floor, v5e-friendly)
        until B * n_tiles >= target_steps so the DMA pipeline overlaps and
        v7x megacore has enough steps to split.
    """
    cap_c = 512 if cap_c is None else cap_c
    cap_hw = 512 if cap_hw is None else cap_hw
    # DMA-burst floor: keep rows >= ~1 KiB (256 f32 / 512 bf16), 128-multiple.
    floor = max(128, _cdiv(1024 // itemsize, 128) * 128)

    def init(dim, cap):
        if dim <= cap:
            return dim                       # full dim -> legal block, no masking
        return max(128, (cap // 128) * 128)  # lane-dense tile

    tc, thw = init(C, cap_c), init(HW, cap_hw)

    def steps(a, b):
        return B * _cdiv(HW, b) * _cdiv(C, a)

    def shrink(t):
        return max(floor, (t // 2) // 128 * 128)

    for _ in range(16):
        cur = steps(tc, thw)
        if cur >= target_steps:
            break
        cand_c, cand_hw = shrink(tc), shrink(thw)
        gain_c = steps(cand_c, thw) if cand_c < tc else -1
        gain_hw = steps(tc, cand_hw) if cand_hw < thw else -1
        if max(gain_c, gain_hw) <= cur:
            break
        if gain_c >= gain_hw:
            tc = cand_c
        else:
            thw = cand_hw
    return tc, thw


def lambda_forward(x: jax.Array, *, tile_c=None, tile_hw=None) -> jax.Array:
    """Pallas implementation of Lambda(lambda x: x.flatten(2).transpose(1, 2)).

    Args:
        x: (B, C, H, W) array (NCHW, like a PyTorch conv output).
        tile_c, tile_hw: optional max tile sizes along C / H*W (128-multiples
            recommended); defaults are picked adaptively.
    Returns:
        (B, H*W, C) array.
    """
    B, C, H, W = x.shape
    HW = H * W
    x_flat = x.reshape(B, C, HW)                       # glue: flatten(2)

    # Degenerate / tiny dims: a <128 output lane dim would force masked
    # vst.msk partial stores and the kernel only adds launch overhead.
    if C < 128 or HW < 128:
        return jnp.transpose(x_flat, (0, 2, 1))

    itemsize = jnp.dtype(x.dtype).itemsize
    tc, thw = _pick_tiles(C, HW, B, itemsize, cap_c=tile_c, cap_hw=tile_hw)

    grid = (B, _cdiv(HW, thw), _cdiv(C, tc))

    # 2 pipelined buffers for the input tile + 2 for the output tile, with 2x
    # headroom for compiler scratch; clamp into [16 MiB, 64 MiB] so the same
    # config is safe on v5e/v6e (128 MiB) and v7x (64 MiB physical).
    vmem_limit = min(64 * 1024 * 1024,
                     max(16 * 1024 * 1024, 8 * tc * thw * itemsize))

    out = pl.pallas_call(
        _transpose_tile_kernel,
        out_shape=jax.ShapeDtypeStruct((B, HW, C), x.dtype),
        grid_spec=pltpu.PrefetchScalarGridSpec(
            num_scalar_prefetch=0,
            grid=grid,
            in_specs=[
                # (tc, thw) tile at block (cj, hi) of the (C, HW) slab.
                pl.BlockSpec((None, tc, thw), lambda b, hi, cj: (b, cj, hi)),
            ],
            # (thw, tc) tile at block (hi, cj) of the (HW, C) output.  Partial
            # edge blocks (ragged C / HW) are masked by Pallas — no padding,
            # no post-kernel slice.
            out_specs=pl.BlockSpec((None, thw, tc), lambda b, hi, cj: (b, hi, cj)),
        ),
        # Pure permutation: every grid axis is independent, so megacore (v7x's
        # 2 TCs) can split tiles even when B is 1 or odd.
        compiler_params=pltpu.CompilerParams(
            dimension_semantics=("parallel", "parallel", "parallel"),
            vmem_limit_bytes=vmem_limit,
        ),
        # Pure memory op hint so XLA's scheduler can overlap surrounding work.
        cost_estimate=pl.CostEstimate(
            flops=0,
            transcendentals=0,
            bytes_accessed=2 * B * C * HW * itemsize,
        ),
    )(x_flat)
    return out
    # TODO(synk): v7x-only micro-opt: for bf16 activations, pltpu.bitcast-pack
    # adjacent pairs into u32 before the tile transpose (and fix up ordering)
    # to halve XLU work at 3.2 TB/s HBM.  Model-level: prefer emitting
    # (B, HW, C) directly from the patch-embed matmul so this whole HBM
    # round trip disappears.


def _ref(x):
    B, C, H, W = x.shape
    return jnp.transpose(x.reshape(B, C, H * W), (0, 2, 1))


if __name__ == "__main__":
    root = jax.random.PRNGKey(0)
    k1, k2, k3, k4 = jax.random.split(root, 4)

    # 1) The module's small spec shape (C=4 < 128: routed to jnp.transpose).
    x1 = jax.random.normal(k1, (2, 4, 16, 16), dtype=jnp.float32)
    out1 = jax.block_until_ready(lambda_forward(x1))
    assert out1.shape == (2, 256, 4), out1.shape
    assert out1.dtype == x1.dtype
    assert jnp.array_equal(out1, _ref(x1)), "mismatch (spec shape)"

    # 2) Multi-tile Pallas path (forced 128x128 tiles, grid=(2,2,2)=8 steps).
    x2 = jax.random.normal(k2, (2, 256, 16, 16), dtype=jnp.float32)
    out2 = jax.block_until_ready(lambda_forward(x2, tile_c=128, tile_hw=128))
    assert out2.shape == (2, 256, 256)
    assert jnp.array_equal(out2, _ref(x2)), "mismatch (tiled path)"

    # 3) Ragged dims (C=200, HW=144 vs 128 tiles): exercises the masked
    #    partial edge blocks — no pad, no post-slice.
    x3 = jax.random.normal(k3, (1, 200, 12, 12), dtype=jnp.float32)
    out3 = jax.block_until_ready(lambda_forward(x3, tile_c=128, tile_hw=128))
    assert out3.shape == (1, 144, 200)
    assert jnp.array_equal(out3, _ref(x3)), "mismatch (ragged path)"

    # 4) bf16 activations through the default adaptive tiling.
    x4 = jax.random.normal(k4, (1, 256, 16, 16), dtype=jnp.float32).astype(jnp.bfloat16)
    out4 = jax.block_until_ready(lambda_forward(x4))
    assert out4.shape == (1, 256, 256) and out4.dtype == jnp.bfloat16
    assert jnp.array_equal(out4, _ref(x4)), "mismatch (bf16 path)"

    print("KERNEL_OK")
</pallas_src>

<mosaic_0001>
module attributes {stable_mosaic.version = 11 : i64} {
  func.func @_transpose_tile_kernel(%arg0: i32, %arg1: i32, %arg2: i32, %arg3: memref<1x128x128xf32, #tpu.memory_space<vmem>>, %arg4: memref<1x128x128xf32, #tpu.memory_space<vmem>>) attributes {dimension_semantics = [#tpu.dimension_semantics<parallel>, #tpu.dimension_semantics<parallel>, #tpu.dimension_semantics<parallel>], iteration_bounds = array<i64: 2, 2, 2>, scalar_prefetch = 0 : i64, scratch_operands = 0 : i64, tpu.core_type = #tpu.core_type<tc>, window_params = [{transform_indices = @transform_0, window_bounds = array<i64: 1, 128, 128>}, {transform_indices = @transform_1, window_bounds = array<i64: 1, 128, 128>}]} {
    %c0 = arith.constant 0 : index
    %c0_0 = arith.constant 0 : index
    %c0_1 = arith.constant 0 : index
    %0 = vector.load %arg3[%c0, %c0_0, %c0_1] : memref<1x128x128xf32, #tpu.memory_space<vmem>>, vector<1x128x128xf32>
    %1 = vector.shape_cast %0 : vector<1x128x128xf32> to vector<128x128xf32>
    %2 = tpu.transpose %1, [1, 0] : vector<128x128xf32> -> vector<128x128xf32>
    %c0_2 = arith.constant 0 : index
    %c0_3 = arith.constant 0 : index
    %c0_4 = arith.constant 0 : index
    %3 = vector.load %arg4[%c0_2, %c0_3, %c0_4] : memref<1x128x128xf32, #tpu.memory_space<vmem>>, vector<1x128x128xf32>
    %4 = vector.shape_cast %3 : vector<1x128x128xf32> to vector<128x128xf32>
    %5 = vector.shape_cast %2 : vector<128x128xf32> to vector<1x128x128xf32>
    tpu.vector_store %arg4[%c0_2, %c0_3, %c0_4], %5 {strides = array<i32>} : memref<1x128x128xf32, #tpu.memory_space<vmem>>, vector<1x128x128xf32>,
    return
  }
  func.func @transform_0(%arg0: i32, %arg1: i32, %arg2: i32) -> (i32, i32, i32) {
    %c0_i32 = arith.constant 0 : i32
    return %arg0, %arg2, %arg1 : i32, i32, i32
  }
  func.func @transform_1(%arg0: i32, %arg1: i32, %arg2: i32) -> (i32, i32, i32) {
    %c0_i32 = arith.constant 0 : i32
    return %arg0, %arg1, %arg2 : i32, i32, i32
  }
}

</mosaic_0001>

<llo_original>
// kernel: tpu_custom_call.1
$region0: #{tpu_custom_call.1}
  #allocation0 [shape = 'u32[]', space=smem, size = 0x4, offset = 0x4, fixed_abs, tag = 'smem constant byte address 0x4 - core index']
  #allocation1 [shape = 'u32[144,128]{1,0:T(1,128)}', space=vmem, size = 0x12000, scoped, tag = 'internal scratch']
  %s0 = inlined_call_operand.hbm [shape: f32[2,256,256], index: 0, kind: input, shape index: {}]
  %s1 = inlined_call_operand.hbm [shape: f32[2,256,256], index: 1, kind: output, shape index: {}]
  %s2 = sld [smem:[#allocation0]]
  $region41: #{tpu_custom_call.1} parent=0
    _
  %s4 = ssub.s32 1, %s2
  %s5 = scalar_select 0, %s4, %s2
  $region1: #{tpu_custom_call.1} parent=0
    #allocation2 [shape = 'u8[131072]{0}', space=vmem, size = 0x20000, scoped, tag = 'input window, operand 0']
    #allocation3 [shape = 's32[2]{0}', space=sflag, size = 0x8, scoped, tag = 'scoped memory for tpu_custom_call.1']
    #allocation4 [shape = 's32[2]{0}', space=sflag, size = 0x8, scoped, tag = 'scoped memory for tpu_custom_call.1']
    #allocation5 [shape = 'u8[131072]{0}', space=vmem, size = 0x20000, scoped, tag = 'output window, operand 0']
    %6 = vsyncpa [#allocation3], 0
    %s7 = scalar_lea.sflag [#allocation3], 1
    %8 = vsyncpa %s7, 0
    %9 = vsyncpa [#allocation4], 0
    %s10 = scalar_lea.sflag [#allocation4], 1
    %11 = vsyncpa %s10, 0
    loop: start=0, step=1, limit=10
    $region2: #{tpu_custom_call.1} parent=1 // loop_pre_header
      _
    $region3: #{tpu_custom_call.1} parent=1 // loop_header
      %s13 = sphi 0, %s17
      %p14 = scmp.ge.s32.totalorder %s13, 10
      %s20 = sphi 0, %s39
      %s21 = sphi 0, %s35
      %s22 = sphi 0, %s31
      %s23 = sphi 0, %s20
      %s24 = sphi 0, %s21
      %s25 = sphi 0, %s22
      %s26 = sphi 0, %s23
      %s27 = sphi 0, %s24
      %s28 = sphi 0, %s25
      %s46 = sphi 0, %s48
      %s49 = sphi 0, %s46
      %s50 = sphi 0, %s49
      %s66 = sphi 0, %s50
      %s76 = sphi 0, %s78
      %s79 = sphi 0, %s76
      %s80 = sphi 0, %s79
      %s96 = sphi 0, %s80
    $region4: #{tpu_custom_call.1} parent=1 // loop_header_branch
      %16 = sbr.rel (%p14) target = $region8
    $region5: #{tpu_custom_call.1} parent=1 // loop_body
      %s18 = ssub.s32 %s13, 1
      %s19 = ssub.s32 %s13, 2
      %s29 = sadd.s32 1, %s22
      %p30 = scmp.ge.s32.totalorder %s29, 2
      %s31 = scalar_select %p30, 0, %s29
      %s32 = sadd.s32 1, %s21
      %s33 = scalar_select %p30, %s32, %s21
      %p34 = scmp.ge.s32.totalorder %s33, 2
      %s35 = scalar_select %p34, 0, %s33
      %s36 = sadd.s32 1, %s20
      %s37 = scalar_select %p34, %s36, %s20
      %p38 = scmp.ge.s32.totalorder %s37, 2
      %s39 = scalar_select %p38, 0, %s37
      %s40 = ssub.s32 %s20, %s39
      %s41 = ssub.s32 %s22, %s31
      %s42 = sor.u32 %s40, %s41
      %s43 = ssub.s32 %s21, %s35
      %s44 = sor.u32 %s42, %s43
      %p45 = scmp.eq.s32.totalorder %s44, 0
      %s47 = sadd.s32 %s46, 1
      %s48 = scalar_select %p45, %s46, %s47
      %p51 = pneg %p45
      %p52 = scmp.eq.s32.totalorder %s13, 7
      %p53 = por %p51, %p52
      %p54 = scmp.ne.s32.totalorder %s46, %s49
      %p55 = scmp.eq.s32.totalorder %s13, 0
      %p56 = por %p54, %p55
      %p57 = scmp.ne.s32.totalorder %s46, %s49
      %p58 = scmp.eq.s32.totalorder %s18, 7
      %p59 = por %p57, %p58
      %p60 = scmp.ne.s32.totalorder %s49, %s50
      %p61 = scmp.eq.s32.totalorder %s18, 0
      %p62 = por %p60, %p61
      %p63 = scmp.ne.s32.totalorder %s49, %s50
      %p64 = scmp.eq.s32.totalorder %s19, 7
      %p65 = por %p63, %p64
      %p67 = scmp.ne.s32.totalorder %s50, %s66
      %p68 = scmp.eq.s32.totalorder %s19, 0
      %p69 = por %p67, %p68
      %s70 = ssub.s32 %s20, %s39
      %s71 = ssub.s32 %s21, %s35
      %s72 = sor.u32 %s70, %s71
      %s73 = ssub.s32 %s22, %s31
      %s74 = sor.u32 %s72, %s73
      %p75 = scmp.eq.s32.totalorder %s74, 0
      %s77 = sadd.s32 %s76, 1
      %s78 = scalar_select %p75, %s76, %s77
      %p81 = pneg %p75
      %p82 = scmp.eq.s32.totalorder %s13, 7
      %p83 = por %p81, %p82
      %p84 = scmp.ne.s32.totalorder %s76, %s79
      %p85 = scmp.eq.s32.totalorder %s13, 0
      %p86 = por %p84, %p85
      %p87 = scmp.ne.s32.totalorder %s76, %s79
      %p88 = scmp.eq.s32.totalorder %s18, 7
      %p89 = por %p87, %p88
      %p90 = scmp.ne.s32.totalorder %s79, %s80
      %p91 = scmp.eq.s32.totalorder %s18, 0
      %p92 = por %p90, %p91
      %p93 = scmp.ne.s32.totalorder %s79, %s80
      %p94 = scmp.eq.s32.totalorder %s19, 7
      %p95 = por %p93, %p94
      %p97 = scmp.ne.s32.totalorder %s80, %s96
      %p98 = scmp.eq.s32.totalorder %s19, 0
      %p99 = por %p97, %p98
      %p100 = scmp.le.s32.totalorder 1, %s13
      %p101 = scmp.lt.s32.totalorder %s13, 9
      %p102 = pnand %p100, %p101
      %p103 = pneg %p102
      // Predicated region
      $region9: #{tpu_custom_call.1} parent=5 // pred_check
        _
      $region10: #{tpu_custom_call.1} parent=5 // pred_check_branch
        %105 = sbr.rel (%p102) target = $region12
      $region11: #{tpu_custom_call.1} parent=5 // pred_region
        %s106 = ssub.s32 %s13, 1
      $region12: #{tpu_custom_call.1} parent=5 // pred_fallthru
        _
      %p107 = scmp.lt.s32.totalorder %s13, 8
      // Predicated region
      $region13: #{tpu_custom_call.1} parent=5 // pred_check
        %p108 = pneg %p107
      $region14: #{tpu_custom_call.1} parent=5 // pred_check_branch
        %110 = sbr.rel (%p108) target = $region16
      $region15: #{tpu_custom_call.1} parent=5 // pred_region
        // Predicated region
        $region17: #{tpu_custom_call.1} parent=15 // pred_check
          %p111 = pneg %p56
        $region18: #{tpu_custom_call.1} parent=15 // pred_check_branch
          %113 = sbr.rel (%p111) target = $region20
        $region19: #{tpu_custom_call.1} parent=15 // pred_region
          %s114 = sand.u32 %s46, 1
          %s115 = scalar_lea.sflag [#allocation3], %s114
          %s116 = sand.u32 %s46, 1
          %s117 = smul.addr %s116, 128
          %s118 = scalar_lea.vmem [#allocation2], %s117
          %s119 = smul.u32 16, %s22
          %s121 = ssub.s32 2048, 2048
          %122 = vsyncadd %s115, %s121
          %s123 = smul.addr %s119, 2
          %s124 = sadd.s32 %s21, %s123
          %s125 = smul.addr %s20, 64
          %s126 = sadd.s32 %s124, %s125
          %s127 = smul.addr %s126, 128
          %s128 = scalar_lea.hbm %s0, %s127
          %s129 = sshll.u32 %s118, 4
          %s130 = int_to_ptr.vmem [resolvable:$true] %s129
          %135 = dma.hbm_to_vmem [thread:$0]  %s128, 2048, %s130, %s115, 256, 128, 8
        $region20: #{tpu_custom_call.1} parent=15 // pred_fallthru
          _
      $region16: #{tpu_custom_call.1} parent=5 // pred_fallthru
        _
      %p136 = scmp.le.s32.totalorder 1, %s13
      %p137 = scmp.lt.s32.totalorder %s13, 9
      %p138 = pnand %p136, %p137
      %p139 = pneg %p138
      // Predicated region
      $region21: #{tpu_custom_call.1} parent=5 // pred_check
        _
      $region22: #{tpu_custom_call.1} parent=5 // pred_check_branch
        %141 = sbr.rel (%p138) target = $region24
      $region23: #{tpu_custom_call.1} parent=5 // pred_region
        %s142 = ssub.s32 %s13, 1
        %s143 = sand.u32 %s49, 1
        %s144 = scalar_lea.sflag [#allocation3], %s143
        %s145 = sand.u32 %s49, 1
        %s146 = smul.addr %s145, 128
        %s147 = scalar_lea.vmem [#allocation2], %s146
        // Predicated region
        $region25: #{tpu_custom_call.1} parent=23 // pred_check
          %p148 = pneg %p62
        $region26: #{tpu_custom_call.1} parent=23 // pred_check_branch
          %150 = sbr.rel (%p148) target = $region28
        $region27: #{tpu_custom_call.1} parent=23 // pred_region
          %151 = dma.done %s144, 2048
        $region28: #{tpu_custom_call.1} parent=23 // pred_fallthru
          _
        %s152 = sand.u32 %s49, 1
        %s153 = scalar_lea.sflag [#allocation3], %s152
        %s154 = sand.u32 %s49, 1
        %s155 = smul.addr %s154, 128
        %s156 = scalar_lea.vmem [#allocation2], %s155
        %p157 = pneg %p62
        %p158 = pneg %p59
        %p159 = pneg %p92
        %p160 = pneg %p89
        %s161 = sand.u32 %s79, 1
        %s162 = scalar_lea.sflag [#allocation4], %s161
        %s163 = sand.u32 %s79, 1
        %s164 = smul.addr %s163, 128
        %s165 = scalar_lea.vmem [#allocation5], %s164
        %s166 = smul.u32 16, %s25
        %s167 = smul.u32 16, %s24
        %v168 = vld [vmem:[%s147] sm:$0xff]
        %v169 = vld [vmem:[%s147 + $0x8] sm:$0xff]
        %v170 = vld [vmem:[%s147 + $0x10] sm:$0xff]
        %v171 = vld [vmem:[%s147 + $0x18] sm:$0xff]
        %v172 = vld [vmem:[%s147 + $0x20] sm:$0xff]
        %v173 = vld [vmem:[%s147 + $0x28] sm:$0xff]
        %v174 = vld [vmem:[%s147 + $0x30] sm:$0xff]
        %v175 = vld [vmem:[%s147 + $0x38] sm:$0xff]
        %v176 = vld [vmem:[%s147 + $0x40] sm:$0xff]
        %v177 = vld [vmem:[%s147 + $0x48] sm:$0xff]
        %v178 = vld [vmem:[%s147 + $0x50] sm:$0xff]
        %v179 = vld [vmem:[%s147 + $0x58] sm:$0xff]
        %v180 = vld [vmem:[%s147 + $0x60] sm:$0xff]
        %v181 = vld [vmem:[%s147 + $0x68] sm:$0xff]
        %v182 = vld [vmem:[%s147 + $0x70] sm:$0xff]
        %v183 = vld [vmem:[%s147 + $0x78] sm:$0xff]
        %184 = vxpose.xlu0.b32.start [1/16] %v168, 128
        %185 = vxpose.xlu0.b32.cont [2/16] %v169, 128
        %186 = vxpose.xlu0.b32.cont [3/16] %v170, 128
        %187 = vxpose.xlu0.b32.cont [4/16] %v171, 128
        %188 = vxpose.xlu0.b32.cont [5/16] %v172, 128
        %189 = vxpose.xlu0.b32.cont [6/16] %v173, 128
        %190 = vxpose.xlu0.b32.cont [7/16] %v174, 128
        %191 = vxpose.xlu0.b32.cont [8/16] %v175, 128
        %192 = vxpose.xlu0.b32.cont [9/16] %v176, 128
        %193 = vxpose.xlu0.b32.cont [10/16] %v177, 128
        %194 = vxpose.xlu0.b32.cont [11/16] %v178, 128
        %195 = vxpose.xlu0.b32.cont [12/16] %v179, 128
        %196 = vxpose.xlu0.b32.cont [13/16] %v180, 128
        %197 = vxpose.xlu0.b32.cont [14/16] %v181, 128
        %198 = vxpose.xlu0.b32.cont [15/16] %v182, 128
        %199 = vxpose.xlu0.b32.end [16/16] %v183, 128
        %v200 = vpop.trf.xlu0
        %v201 = vpop.trf.xlu0
        %v202 = vpop.trf.xlu0
        %v203 = vpop.trf.xlu0
        %v204 = vpop.trf.xlu0
        %v205 = vpop.trf.xlu0
        %v206 = vpop.trf.xlu0
        %v207 = vpop.trf.xlu0
        %v208 = vpop.trf.xlu0
        %v209 = vpop.trf.xlu0
        %v210 = vpop.trf.xlu0
        %v211 = vpop.trf.xlu0
        %v212 = vpop.trf.xlu0
        %v213 = vpop.trf.xlu0
        %v214 = vpop.trf.xlu0
        %v215 = vpop.trf.xlu0
        %216 = vst [vmem:[%s165] sm:$0xff] %v200
        %217 = vst [vmem:[%s165 + $0x8] sm:$0xff] %v201
        %218 = vst [vmem:[%s165 + $0x10] sm:$0xff] %v202
        %219 = vst [vmem:[%s165 + $0x18] sm:$0xff] %v203
        %220 = vst [vmem:[%s165 + $0x20] sm:$0xff] %v204
        %221 = vst [vmem:[%s165 + $0x28] sm:$0xff] %v205
        %222 = vst [vmem:[%s165 + $0x30] sm:$0xff] %v206
        %223 = vst [vmem:[%s165 + $0x38] sm:$0xff] %v207
        %224 = vst [vmem:[%s165 + $0x40] sm:$0xff] %v208
        %225 = vst [vmem:[%s165 + $0x48] sm:$0xff] %v209
        %226 = vst [vmem:[%s165 + $0x50] sm:$0xff] %v210
        %227 = vst [vmem:[%s165 + $0x58] sm:$0xff] %v211
        %228 = vst [vmem:[%s165 + $0x60] sm:$0xff] %v212
        %229 = vst [vmem:[%s165 + $0x68] sm:$0xff] %v213
        %230 = vst [vmem:[%s165 + $0x70] sm:$0xff] %v214
        %231 = vst [vmem:[%s165 + $0x78] sm:$0xff] %v215
        %s232 = sand.u32 %s79, 1
        %s233 = scalar_lea.sflag [#allocation4], %s232
        %s234 = sand.u32 %s79, 1
        %s235 = smul.addr %s234, 128
        %s236 = scalar_lea.vmem [#allocation5], %s235
        // Predicated region
        $region29: #{tpu_custom_call.1} parent=23 // pred_check
          %p237 = pneg %p89
        $region30: #{tpu_custom_call.1} parent=23 // pred_check_branch
          %239 = sbr.rel (%p237) target = $region32
        $region31: #{tpu_custom_call.1} parent=23 // pred_region
          %s240 = smul.u32 16, %s24
          %s242 = ssub.s32 2048, 2048
          %243 = vsyncadd %s233, %s242
          %s244 = smul.addr %s240, 2
          %s245 = sadd.s32 %s25, %s244
          %s246 = smul.addr %s23, 64
          %s247 = sadd.s32 %s245, %s246
          %s248 = smul.addr %s247, 128
          %s249 = scalar_lea.hbm %s1, %s248
          %s250 = sshll.u32 %s236, 4
          %s251 = int_to_ptr.vmem [resolvable:$true] %s250
          %256 = dma.vmem_to_hbm [thread:$0]  %s251, 2048, %s249, %s233, 128, 256, 8
        $region32: #{tpu_custom_call.1} parent=23 // pred_fallthru
          _
      $region24: #{tpu_custom_call.1} parent=5 // pred_fallthru
        _
      %p257 = scmp.le.s32.totalorder 2, %s13
      // Predicated region
      $region33: #{tpu_custom_call.1} parent=5 // pred_check
        %p258 = pneg %p257
      $region34: #{tpu_custom_call.1} parent=5 // pred_check_branch
        %260 = sbr.rel (%p258) target = $region36
      $region35: #{tpu_custom_call.1} parent=5 // pred_region
        %s261 = ssub.s32 %s13, 2
        // Predicated region
        $region37: #{tpu_custom_call.1} parent=35 // pred_check
          %p262 = pneg %p95
        $region38: #{tpu_custom_call.1} parent=35 // pred_check_branch
          %264 = sbr.rel (%p262) target = $region40
        $region39: #{tpu_custom_call.1} parent=35 // pred_region
          %s265 = sand.u32 %s80, 1
          %s266 = scalar_lea.sflag [#allocation4], %s265
          %s267 = sand.u32 %s80, 1
          %s268 = smul.addr %s267, 128
          %s269 = scalar_lea.vmem [#allocation5], %s268
          %270 = dma.done %s266, 2048
        $region40: #{tpu_custom_call.1} parent=35 // pred_fallthru
          _
      $region36: #{tpu_custom_call.1} parent=5 // pred_fallthru
        _
    $region6: #{tpu_custom_call.1} parent=1 // loop_footer
      %s17 = sadd.s32 1, %s13
    $region7: #{tpu_custom_call.1} parent=1 // loop_footer_branch
      %12 = sbr.rel target = $region3
    $region8: #{tpu_custom_call.1} parent=1 // loop_exit
      _
    %271 = vsyncpa [#allocation3], 1
    %s272 = scalar_lea.sflag [#allocation3], 1
    %273 = vsyncpa %s272, 1
    %274 = vsyncpa [#allocation4], 1
    %s275 = scalar_lea.sflag [#allocation4], 1
    %276 = vsyncpa %s275, 1

</llo_original>
